<compile_context>
chip_gen: v7x
topology: tpu7x:2x2x1
jax: 0.10.0
libtpu: 0.0.40
codegen_flags: <defaults>
</compile_context>

<pallas_src>
import jax
import jax.numpy as jnp
from jax import lax
from jax.experimental import pallas as pl
from jax.experimental.pallas import tpu as pltpu


_MIB = 1 << 20
_TARGET_X_BLOCK_BYTES = 1 * _MIB     # >=512 KiB blocks reach ~85% of HBM roofline
_X_VMEM_BUDGET_BYTES = 40 * _MIB     # double-buffered x must fit v7x's 64 MiB VMEM


def _round_up(n, m):
    return (n + m - 1) // m * m


def _vmem_tile_bytes(shape, dtype):
    """Bytes a 2-D block occupies in VMEM ((sublane, 128)-padded, dtype-aware)."""
    itemsize = jnp.dtype(dtype).itemsize
    sub = 32 // itemsize                      # 8 for f32, 16 for bf16, 32 for 8-bit
    r, c = shape
    return _round_up(r, sub) * _round_up(c, 128) * itemsize


def _choose_batch_tile(B, input_dim, itemsize):
    """Pick the batch tile from bandwidth, grid-step-count and VMEM constraints."""
    if B <= 128:
        return B                              # single full-array block; latency-bound
    # (a) bandwidth: ~1 MiB of useful x per block so the ~0.35us per-step
    #     overhead is negligible vs the block's DMA time.
    bt_bw = max(128, (_TARGET_X_BLOCK_BYTES // (input_dim * itemsize)) // 128 * 128)
    # (b) >=2 grid steps so v7x's two TensorCores both get work; >=4 once the
    #     batch is big enough so the pipeline has overlap on every chip.
    min_steps = 4 if B >= 512 else 2
    bt_steps = max(128, (B // min_steps) // 128 * 128)
    # (c) VMEM: double-buffered, lane-padded x block stays inside the budget.
    #     Shrink the tile here rather than just clamping vmem_limit_bytes.
    lane_padded_row = _round_up(input_dim, 128) * itemsize
    bt_vmem = max(128, (_X_VMEM_BUDGET_BYTES // (2 * lane_padded_row)) // 128 * 128)
    return min(bt_bw, bt_steps, bt_vmem)


def _reward_mlp_kernel(x_ref,
                       w1_ref, b1_ref,
                       w2_ref, b2_ref,
                       w3_ref, b3_ref,
                       w4_ref, b4_ref,
                       o_ref):
    # x_ref: [bt, input_dim] -- native layout (batch on sublanes, feat on lanes).
    # Layer 1: contract input_dim of both operands -> [hidden, bt].  The RHS
    # "transpose" is handled by the MXU/Mosaic; no wrapper copy of x needed.
    h = lax.dot_general(w1_ref[...], x_ref[...],
                        dimension_numbers=(((1,), (1,)), ((), ())),
                        preferred_element_type=jnp.float32)
    h = jnp.maximum(h + b1_ref[...], 0.0)             # f32 VPU (v5e-safe)

    # Layers 2-3: tiny f32 MXU matmuls; activations stay f32 end to end.
    h = jnp.dot(w2_ref[...], h, preferred_element_type=jnp.float32)
    h = jnp.maximum(h + b2_ref[...], 0.0)

    h = jnp.dot(w3_ref[...], h, preferred_element_type=jnp.float32)
    h = jnp.maximum(h + b3_ref[...], 0.0)

    # Layer 4 (16 -> 1): VPU multiply + sublane reduce (XLU) instead of an
    # M=1 matmul that would waste the MXU.
    out = jnp.sum(w4_ref[...] * h, axis=0, keepdims=True)     # [1, bt]
    o_ref[...] = jnp.tanh(out + b4_ref[...])                   # EUP tanh (f32)


def reward_model_forward(x, params, *, batch_tile=None):
    """RewardModel forward pass as a single Pallas TPU kernel.

    x: [B, input_dim], f32 or bf16 (used as-is: no transpose / pad / cast copies).
    params: dict w1..w4 / b1..b4 in the layout documented at the top of the file.
    """
    B, input_dim = x.shape
    itemsize = jnp.dtype(x.dtype).itemsize

    if batch_tile is None:
        batch_tile = _choose_batch_tile(B, input_dim, itemsize)
    if batch_tile >= B:
        batch_tile = B                          # one full-array block (any B is legal)
    else:
        batch_tile = max(128, _round_up(batch_tile, 128))   # lane-dense output blocks
        if batch_tile >= B:
            batch_tile = B
    grid = (pl.cdiv(B, batch_tile),)            # ragged last block is masked by Pallas

    # Only w1 is matched to x's dtype (bandwidth-dominant first matmul; bf16 MXU
    # path when x is stored in bf16 upstream).  Everything else stays f32.
    w1 = params["w1"].astype(x.dtype)
    b1 = params["b1"].astype(jnp.float32)
    w2 = params["w2"].astype(jnp.float32)
    b2 = params["b2"].astype(jnp.float32)
    w3 = params["w3"].astype(jnp.float32)
    b3 = params["b3"].astype(jnp.float32)
    w4 = params["w4"].astype(jnp.float32)
    b4 = params["b4"].astype(jnp.float32)

    # Explicit VMEM budget from the real padded footprint (double-buffered x/out
    # streams + params), clamped well inside v7x's 64 MiB physical VMEM.
    x_blk = _vmem_tile_bytes((batch_tile, input_dim), x.dtype)
    o_blk = _vmem_tile_bytes((1, batch_tile), jnp.float32)
    param_blk = sum(_vmem_tile_bytes(a.shape, a.dtype)
                    for a in (w1, b1, w2, b2, w3, b3, w4, b4))
    vmem_needed = 2 * (x_blk + o_blk) + 2 * param_blk + 2 * _MIB
    vmem_limit = int(min(max(vmem_needed, 32 * _MIB), 50 * _MIB))

    full = lambda arr: pl.BlockSpec(arr.shape, lambda i: (0, 0))

    out = pl.pallas_call(
        _reward_mlp_kernel,
        out_shape=jax.ShapeDtypeStruct((1, B), jnp.float32),
        grid_spec=pltpu.PrefetchScalarGridSpec(
            num_scalar_prefetch=0,
            grid=grid,
            in_specs=[
                pl.BlockSpec((batch_tile, input_dim), lambda i: (i, 0)),
                full(w1), full(b1),
                full(w2), full(b2),
                full(w3), full(b3),
                full(w4), full(b4),
            ],
            out_specs=pl.BlockSpec((1, batch_tile), lambda i: (0, i)),
        ),
        compiler_params=pltpu.CompilerParams(
            dimension_semantics=("parallel",),
            vmem_limit_bytes=vmem_limit),
    )(x, w1, b1, w2, b2, w3, b3, w4, b4)

    # Back to the module's [B, 1] output layout (trivial reshape, no transpose).
    return out.reshape(B, 1)


def init_reward_model_params(key, input_dim, hidden_dim=64):
    """Deterministic init mimicking nn.Linear's U(-1/sqrt(fan_in), 1/sqrt(fan_in))."""
    dims = [(input_dim, hidden_dim), (hidden_dim, 32), (32, 16), (16, 1)]
    params = {}
    for idx, (fan_in, fan_out) in enumerate(dims, start=1):
        key, kw, kb = jax.random.split(key, 3)
        bound = 1.0 / jnp.sqrt(jnp.float32(fan_in))
        if idx < 4:
            w = jax.random.uniform(kw, (fan_out, fan_in), jnp.float32,
                                   minval=-bound, maxval=bound)   # [out, in]
        else:
            w = jax.random.uniform(kw, (fan_in, fan_out), jnp.float32,
                                   minval=-bound, maxval=bound)   # [16, 1] column
        b = jax.random.uniform(kb, (fan_out, 1), jnp.float32,
                               minval=-bound, maxval=bound)       # [out, 1]
        params[f"w{idx}"] = w
        params[f"b{idx}"] = b
    return params


def reward_model_reference(x, params):
    """Plain-JAX reference (batch-major) for correctness checking."""
    h = jnp.maximum(x @ params["w1"].T + params["b1"].T, 0.0)
    h = jnp.maximum(h @ params["w2"].T + params["b2"].T, 0.0)
    h = jnp.maximum(h @ params["w3"].T + params["b3"].T, 0.0)
    return jnp.tanh(h @ params["w4"] + params["b4"].T)


if __name__ == "__main__":
    key = jax.random.PRNGKey(0)
    k_params, k_x = jax.random.split(key)

    batch, input_dim, hidden_dim = 256, 32, 64
    params = init_reward_model_params(k_params, input_dim, hidden_dim)
    x = jax.random.normal(k_x, (batch, input_dim), jnp.float32)
    ref = reward_model_reference(x, params)

    # Default tiling: 2 x 128 grid (pipelining + both v7x TensorCores busy).
    out = jax.block_until_ready(reward_model_forward(x, params))
    assert out.shape == (batch, 1), out.shape
    assert jnp.allclose(out, ref, atol=1e-5, rtol=1e-5), (
        float(jnp.max(jnp.abs(out - ref))))

    # Ragged multi-step grid (300 rows -> 3 x 128 blocks, masked last block,
    # no wrapper-side pad copy).
    x_rag = jax.random.normal(jax.random.PRNGKey(1), (300, input_dim), jnp.float32)
    out_rag = jax.block_until_ready(reward_model_forward(x_rag, params))
    ref_rag = reward_model_reference(x_rag, params)
    assert out_rag.shape == (300, 1), out_rag.shape
    assert jnp.allclose(out_rag, ref_rag, atol=1e-5, rtol=1e-5), (
        float(jnp.max(jnp.abs(out_rag - ref_rag))))

    # Small non-aligned batch: single full-array block, no padding anywhere.
    x_odd = jax.random.normal(jax.random.PRNGKey(2), (37, input_dim), jnp.float32)
    out_odd = jax.block_until_ready(reward_model_forward(x_odd, params))
    ref_odd = reward_model_reference(x_odd, params)
    assert out_odd.shape == (37, 1), out_odd.shape
    assert jnp.allclose(out_odd, ref_odd, atol=1e-5, rtol=1e-5), (
        float(jnp.max(jnp.abs(out_odd - ref_odd))))

    # Upstream-bf16 x: no wrapper cast; only layer 1 runs in bf16 (f32 accum),
    # later layers / activations stay f32.
    x_bf16 = x.astype(jnp.bfloat16)
    out_bf16 = jax.block_until_ready(reward_model_forward(x_bf16, params))
    ref_bf16 = reward_model_reference(x_bf16.astype(jnp.float32), params)
    assert out_bf16.shape == (batch, 1), out_bf16.shape
    assert jnp.allclose(out_bf16, ref_bf16, atol=3e-2, rtol=3e-2), (
        float(jnp.max(jnp.abs(out_bf16 - ref_bf16))))

    print("KERNEL_OK")
</pallas_src>

<mosaic_0001>
module attributes {stable_mosaic.version = 11 : i64} {
  func.func @_reward_mlp_kernel(%arg0: i32, %arg1: memref<128x32xf32, #tpu.memory_space<vmem>>, %arg2: memref<64x32xf32, #tpu.memory_space<vmem>>, %arg3: memref<64x1xf32, #tpu.memory_space<vmem>>, %arg4: memref<32x64xf32, #tpu.memory_space<vmem>>, %arg5: memref<32x1xf32, #tpu.memory_space<vmem>>, %arg6: memref<16x32xf32, #tpu.memory_space<vmem>>, %arg7: memref<16x1xf32, #tpu.memory_space<vmem>>, %arg8: memref<16x1xf32, #tpu.memory_space<vmem>>, %arg9: memref<1x1xf32, #tpu.memory_space<vmem>>, %arg10: memref<1x128xf32, #tpu.memory_space<vmem>>) attributes {dimension_semantics = [#tpu.dimension_semantics<parallel>], iteration_bounds = array<i64: 2>, scalar_prefetch = 0 : i64, scratch_operands = 0 : i64, tpu.core_type = #tpu.core_type<tc>, window_params = [{transform_indices = @transform_0, window_bounds = array<i64: 128, 32>}, {pipeline_mode = #tpu.pipeline_mode<synchronous>, transform_indices = @transform_1, window_bounds = array<i64: 64, 32>}, {pipeline_mode = #tpu.pipeline_mode<synchronous>, transform_indices = @transform_2, window_bounds = array<i64: 64, 1>}, {pipeline_mode = #tpu.pipeline_mode<synchronous>, transform_indices = @transform_3, window_bounds = array<i64: 32, 64>}, {pipeline_mode = #tpu.pipeline_mode<synchronous>, transform_indices = @transform_4, window_bounds = array<i64: 32, 1>}, {pipeline_mode = #tpu.pipeline_mode<synchronous>, transform_indices = @transform_5, window_bounds = array<i64: 16, 32>}, {pipeline_mode = #tpu.pipeline_mode<synchronous>, transform_indices = @transform_6, window_bounds = array<i64: 16, 1>}, {pipeline_mode = #tpu.pipeline_mode<synchronous>, transform_indices = @transform_7, window_bounds = array<i64: 16, 1>}, {pipeline_mode = #tpu.pipeline_mode<synchronous>, transform_indices = @transform_8, window_bounds = array<i64: 1, 1>}, {transform_indices = @transform_9, window_bounds = array<i64: 1, 128>}]} {
    %c0 = arith.constant 0 : index
    %c0_0 = arith.constant 0 : index
    %0 = vector.load %arg2[%c0, %c0_0] : memref<64x32xf32, #tpu.memory_space<vmem>>, vector<64x32xf32>
    %c0_1 = arith.constant 0 : index
    %c0_2 = arith.constant 0 : index
    %1 = vector.load %arg1[%c0_1, %c0_2] : memref<128x32xf32, #tpu.memory_space<vmem>>, vector<128x32xf32>
    %cst = arith.constant dense<0.000000e+00> : vector<64x128xf32>
    %2 = tpu.matmul %0, %1, %cst {dimension_numbers = #tpu.dot_dimension_numbers<[1], [1], [0], [0], [0, 0, 1, 0], [], []>} : vector<64x32xf32>, vector<128x32xf32>, vector<64x128xf32> -> vector<64x128xf32>
    %c0_3 = arith.constant 0 : index
    %c0_4 = arith.constant 0 : index
    %3 = vector.load %arg3[%c0_3, %c0_4] : memref<64x1xf32, #tpu.memory_space<vmem>>, vector<64x1xf32>
    %4 = vector.broadcast %3 : vector<64x1xf32> to vector<64x128xf32>
    %5 = arith.addf %2, %4 : vector<64x128xf32>
    %cst_5 = arith.constant 0.000000e+00 : f32
    %6 = vector.broadcast %cst_5 : f32 to vector<64x128xf32>
    %7 = arith.maximumf %5, %6 : vector<64x128xf32>
    %c0_6 = arith.constant 0 : index
    %c0_7 = arith.constant 0 : index
    %8 = vector.load %arg4[%c0_6, %c0_7] : memref<32x64xf32, #tpu.memory_space<vmem>>, vector<32x64xf32>
    %cst_8 = arith.constant dense<0.000000e+00> : vector<32x128xf32>
    %9 = tpu.matmul %8, %7, %cst_8 {dimension_numbers = #tpu.dot_dimension_numbers<[1], [0], [0], [1], [0, 0, 1, 1], [], []>} : vector<32x64xf32>, vector<64x128xf32>, vector<32x128xf32> -> vector<32x128xf32>
    %c0_9 = arith.constant 0 : index
    %c0_10 = arith.constant 0 : index
    %10 = vector.load %arg5[%c0_9, %c0_10] : memref<32x1xf32, #tpu.memory_space<vmem>>, vector<32x1xf32>
    %11 = vector.broadcast %10 : vector<32x1xf32> to vector<32x128xf32>
    %12 = arith.addf %9, %11 : vector<32x128xf32>
    %cst_11 = arith.constant 0.000000e+00 : f32
    %13 = vector.broadcast %cst_11 : f32 to vector<32x128xf32>
    %14 = arith.maximumf %12, %13 : vector<32x128xf32>
    %c0_12 = arith.constant 0 : index
    %c0_13 = arith.constant 0 : index
    %15 = vector.load %arg6[%c0_12, %c0_13] : memref<16x32xf32, #tpu.memory_space<vmem>>, vector<16x32xf32>
    %cst_14 = arith.constant dense<0.000000e+00> : vector<16x128xf32>
    %16 = tpu.matmul %15, %14, %cst_14 {dimension_numbers = #tpu.dot_dimension_numbers<[1], [0], [0], [1], [0, 0, 1, 1], [], []>} : vector<16x32xf32>, vector<32x128xf32>, vector<16x128xf32> -> vector<16x128xf32>
    %c0_15 = arith.constant 0 : index
    %c0_16 = arith.constant 0 : index
    %17 = vector.load %arg7[%c0_15, %c0_16] : memref<16x1xf32, #tpu.memory_space<vmem>>, vector<16x1xf32>
    %18 = vector.broadcast %17 : vector<16x1xf32> to vector<16x128xf32>
    %19 = arith.addf %16, %18 : vector<16x128xf32>
    %cst_17 = arith.constant 0.000000e+00 : f32
    %20 = vector.broadcast %cst_17 : f32 to vector<16x128xf32>
    %21 = arith.maximumf %19, %20 : vector<16x128xf32>
    %c0_18 = arith.constant 0 : index
    %c0_19 = arith.constant 0 : index
    %22 = vector.load %arg8[%c0_18, %c0_19] : memref<16x1xf32, #tpu.memory_space<vmem>>, vector<16x1xf32>
    %23 = vector.broadcast %22 : vector<16x1xf32> to vector<16x128xf32>
    %24 = arith.mulf %23, %21 : vector<16x128xf32>
    %cst_20 = arith.constant dense<0.000000e+00> : vector<128xf32>
    %25 = vector.multi_reduction <add>, %24, %cst_20 [0] : vector<16x128xf32> to vector<128xf32>
    %26 = vector.shape_cast %25 : vector<128xf32> to vector<1x128xf32>
    %c0_21 = arith.constant 0 : index
    %c0_22 = arith.constant 0 : index
    %27 = vector.load %arg9[%c0_21, %c0_22] : memref<1x1xf32, #tpu.memory_space<vmem>>, vector<1x1xf32>
    %28 = vector.broadcast %27 : vector<1x1xf32> to vector<1x128xf32>
    %29 = arith.addf %26, %28 : vector<1x128xf32>
    %30 = math.tanh %29 : vector<1x128xf32>
    %c0_23 = arith.constant 0 : index
    %c0_24 = arith.constant 0 : index
    %31 = vector.load %arg10[%c0_23, %c0_24] : memref<1x128xf32, #tpu.memory_space<vmem>>, vector<1x128xf32>
    tpu.vector_store %arg10[%c0_23, %c0_24], %30 {strides = array<i32>} : memref<1x128xf32, #tpu.memory_space<vmem>>, vector<1x128xf32>,
    return
  }
  func.func @transform_0(%arg0: i32) -> (i32, i32) {
    %c0_i32 = arith.constant 0 : i32
    %c0_i32_0 = arith.constant 0 : i32
    return %arg0, %c0_i32 : i32, i32
  }
  func.func @transform_1(%arg0: i32) -> (i32, i32) {
    %c0_i32 = arith.constant 0 : i32
    %c0_i32_0 = arith.constant 0 : i32
    %c0_i32_1 = arith.constant 0 : i32
    return %c0_i32, %c0_i32_0 : i32, i32
  }
  func.func @transform_2(%arg0: i32) -> (i32, i32) {
    %c0_i32 = arith.constant 0 : i32
    %c0_i32_0 = arith.constant 0 : i32
    %c0_i32_1 = arith.constant 0 : i32
    return %c0_i32, %c0_i32_0 : i32, i32
  }
  func.func @transform_3(%arg0: i32) -> (i32, i32) {
    %c0_i32 = arith.constant 0 : i32
    %c0_i32_0 = arith.constant 0 : i32
    %c0_i32_1 = arith.constant 0 : i32
    return %c0_i32, %c0_i32_0 : i32, i32
  }
  func.func @transform_4(%arg0: i32) -> (i32, i32) {
    %c0_i32 = arith.constant 0 : i32
    %c0_i32_0 = arith.constant 0 : i32
    %c0_i32_1 = arith.constant 0 : i32
    return %c0_i32, %c0_i32_0 : i32, i32
  }
  func.func @transform_5(%arg0: i32) -> (i32, i32) {
    %c0_i32 = arith.constant 0 : i32
    %c0_i32_0 = arith.constant 0 : i32
    %c0_i32_1 = arith.constant 0 : i32
    return %c0_i32, %c0_i32_0 : i32, i32
  }
  func.func @transform_6(%arg0: i32) -> (i32, i32) {
    %c0_i32 = arith.constant 0 : i32
    %c0_i32_0 = arith.constant 0 : i32
    %c0_i32_1 = arith.constant 0 : i32
    return %c0_i32, %c0_i32_0 : i32, i32
  }
  func.func @transform_7(%arg0: i32) -> (i32, i32) {
    %c0_i32 = arith.constant 0 : i32
    %c0_i32_0 = arith.constant 0 : i32
    %c0_i32_1 = arith.constant 0 : i32
    return %c0_i32, %c0_i32_0 : i32, i32
  }
  func.func @transform_8(%arg0: i32) -> (i32, i32) {
    %c0_i32 = arith.constant 0 : i32
    %c0_i32_0 = arith.constant 0 : i32
    %c0_i32_1 = arith.constant 0 : i32
    return %c0_i32, %c0_i32_0 : i32, i32
  }
  func.func @transform_9(%arg0: i32) -> (i32, i32) {
    %c0_i32 = arith.constant 0 : i32
    %c0_i32_0 = arith.constant 0 : i32
    return %c0_i32, %arg0 : i32, i32
  }
}

</mosaic_0001>

<llo_original>
// kernel: tpu_custom_call.1
$region0: #{tpu_custom_call.1}
  #allocation0 [shape = 'u32[]', space=smem, size = 0x4, offset = 0x4, fixed_abs, tag = 'smem constant byte address 0x4 - core index']
  #allocation1 [shape = 'u32[144,128]{1,0:T(1,128)}', space=vmem, size = 0x12000, scoped, tag = 'internal scratch']
  #allocation2 [shape = 'f32[1,1]{1,0:T(1,128)S(1)}', space=vmem, size = 0x200, scoped, tag = 'scoped memory for tpu_custom_call.1']
  %s0 = inlined_call_operand.vmem [shape: f32[256,32], index: 0, kind: input, shape index: {}]
  %s1 = inlined_call_operand.vmem [shape: f32[64,32], index: 1, kind: input, shape index: {}]
  %s2 = inlined_call_operand.vmem [shape: f32[64,1], index: 2, kind: input, shape index: {}]
  %s3 = inlined_call_operand.vmem [shape: f32[32,64], index: 3, kind: input, shape index: {}]
  %s4 = inlined_call_operand.vmem [shape: f32[32,1], index: 4, kind: input, shape index: {}]
  %s5 = inlined_call_operand.vmem [shape: f32[16,32], index: 5, kind: input, shape index: {}]
  %s6 = inlined_call_operand.vmem [shape: f32[16,1], index: 6, kind: input, shape index: {}]
  %s7 = inlined_call_operand.vmem [shape: f32[16,1], index: 7, kind: input, shape index: {}]
  %s8 = inlined_call_operand.<no memory space> [shape: f32[1,1], index: 8, kind: input, shape index: {}]
  %s9 = inlined_call_operand.hbm [shape: f32[1,256], index: 9, kind: output, shape index: {}]
  %s10 = sld [smem:[#allocation0]]
  $region69: #{tpu_custom_call.1} parent=0
    _
  %s12 = ssub.s32 1, %s10
  %s13 = scalar_select 0, %s12, %s10
  %v14 = vstv %s8
  %15 = vst [vmem:[#allocation2] sm:$0x1] %v14
  $region1: #{tpu_custom_call.1} parent=0
    #allocation3 [shape = 'u8[1024]{0}', space=vmem, size = 0x400, scoped, tag = 'output window, operand 0']
    #allocation4 [shape = 's32[2]{0}', space=sflag, size = 0x8, scoped, tag = 'scoped memory for tpu_custom_call.1']
    %16 = vsyncpa [#allocation4], 0
    %s17 = scalar_lea.sflag [#allocation4], 1
    %18 = vsyncpa %s17, 0
    loop: start=0, step=1, limit=4
    $region2: #{tpu_custom_call.1} parent=1 // loop_pre_header
      _
    $region3: #{tpu_custom_call.1} parent=1 // loop_header
      %s20 = sphi 0, %s24
      %p21 = scmp.ge.s32.totalorder %s20, 4
      %s30 = sphi 0, %s32
      %s33 = sphi 0, %s30
      %s34 = sphi 0, %s33
      %s50 = sphi 0, %s34
      %s54 = sphi 0, %s54
      %s56 = sphi 0, %s54
      %s57 = sphi 0, %s56
      %s71 = sphi 0, %s57
      %s75 = sphi 0, %s75
      %s77 = sphi 0, %s75
      %s78 = sphi 0, %s77
      %s92 = sphi 0, %s78
      %s96 = sphi 0, %s96
      %s98 = sphi 0, %s96
      %s99 = sphi 0, %s98
      %s113 = sphi 0, %s99
      %s117 = sphi 0, %s117
      %s119 = sphi 0, %s117
      %s120 = sphi 0, %s119
      %s134 = sphi 0, %s120
      %s138 = sphi 0, %s138
      %s140 = sphi 0, %s138
      %s141 = sphi 0, %s140
      %s155 = sphi 0, %s141
      %s159 = sphi 0, %s159
      %s161 = sphi 0, %s159
      %s162 = sphi 0, %s161
      %s176 = sphi 0, %s162
      %s180 = sphi 0, %s180
      %s182 = sphi 0, %s180
      %s183 = sphi 0, %s182
      %s197 = sphi 0, %s183
      %s201 = sphi 0, %s201
      %s203 = sphi 0, %s201
      %s204 = sphi 0, %s203
      %s218 = sphi 0, %s204
      %s224 = sphi 0, %s226
      %s227 = sphi 0, %s224
      %s228 = sphi 0, %s227
      %s244 = sphi 0, %s228
    $region4: #{tpu_custom_call.1} parent=1 // loop_header_branch
      %23 = sbr.rel (%p21) target = $region8
    $region5: #{tpu_custom_call.1} parent=1 // loop_body
      %s25 = ssub.s32 %s20, 1
      %s26 = ssub.s32 %s20, 2
      %s27 = sadd.s32 %s20, 1
      %s28 = ssub.s32 %s20, %s27
      %p29 = scmp.eq.s32.totalorder %s28, 0
      %s31 = sadd.s32 %s30, 1
      %s32 = scalar_select %p29, %s30, %s31
      %p35 = pneg %p29
      %p36 = scmp.eq.s32.totalorder %s20, 1
      %p37 = por %p35, %p36
      %p38 = scmp.ne.s32.totalorder %s30, %s33
      %p39 = scmp.eq.s32.totalorder %s20, 0
      %p40 = por %p38, %p39
      %p41 = scmp.ne.s32.totalorder %s30, %s33
      %p42 = scmp.eq.s32.totalorder %s25, 1
      %p43 = por %p41, %p42
      %p44 = scmp.ne.s32.totalorder %s33, %s34
      %p45 = scmp.eq.s32.totalorder %s25, 0
      %p46 = por %p44, %p45
      %p47 = scmp.ne.s32.totalorder %s33, %s34
      %p48 = scmp.eq.s32.totalorder %s26, 1
      %p49 = por %p47, %p48
      %p51 = scmp.ne.s32.totalorder %s34, %s50
      %p52 = scmp.eq.s32.totalorder %s26, 0
      %p53 = por %p51, %p52
      %s55 = sadd.s32 %s54, 1
      %p58 = scmp.eq.s32.totalorder %s20, 1
      %p59 = scmp.ne.s32.totalorder %s54, %s56
      %p60 = scmp.eq.s32.totalorder %s20, 0
      %p61 = por %p59, %p60
      %p62 = scmp.ne.s32.totalorder %s54, %s56
      %p63 = scmp.eq.s32.totalorder %s25, 1
      %p64 = por %p62, %p63
      %p65 = scmp.ne.s32.totalorder %s56, %s57
      %p66 = scmp.eq.s32.totalorder %s25, 0
      %p67 = por %p65, %p66
      %p68 = scmp.ne.s32.totalorder %s56, %s57
      %p69 = scmp.eq.s32.totalorder %s26, 1
      %p70 = por %p68, %p69
      %p72 = scmp.ne.s32.totalorder %s57, %s71
      %p73 = scmp.eq.s32.totalorder %s26, 0
      %p74 = por %p72, %p73
      %s76 = sadd.s32 %s75, 1
      %p79 = scmp.eq.s32.totalorder %s20, 1
      %p80 = scmp.ne.s32.totalorder %s75, %s77
      %p81 = scmp.eq.s32.totalorder %s20, 0
      %p82 = por %p80, %p81
      %p83 = scmp.ne.s32.totalorder %s75, %s77
      %p84 = scmp.eq.s32.totalorder %s25, 1
      %p85 = por %p83, %p84
      %p86 = scmp.ne.s32.totalorder %s77, %s78
      %p87 = scmp.eq.s32.totalorder %s25, 0
      %p88 = por %p86, %p87
      %p89 = scmp.ne.s32.totalorder %s77, %s78
      %p90 = scmp.eq.s32.totalorder %s26, 1
      %p91 = por %p89, %p90
      %p93 = scmp.ne.s32.totalorder %s78, %s92
      %p94 = scmp.eq.s32.totalorder %s26, 0
      %p95 = por %p93, %p94
      %s97 = sadd.s32 %s96, 1
      %p100 = scmp.eq.s32.totalorder %s20, 1
      %p101 = scmp.ne.s32.totalorder %s96, %s98
      %p102 = scmp.eq.s32.totalorder %s20, 0
      %p103 = por %p101, %p102
      %p104 = scmp.ne.s32.totalorder %s96, %s98
      %p105 = scmp.eq.s32.totalorder %s25, 1
      %p106 = por %p104, %p105
      %p107 = scmp.ne.s32.totalorder %s98, %s99
      %p108 = scmp.eq.s32.totalorder %s25, 0
      %p109 = por %p107, %p108
      %p110 = scmp.ne.s32.totalorder %s98, %s99
      %p111 = scmp.eq.s32.totalorder %s26, 1
      %p112 = por %p110, %p111
      %p114 = scmp.ne.s32.totalorder %s99, %s113
      %p115 = scmp.eq.s32.totalorder %s26, 0
      %p116 = por %p114, %p115
      %s118 = sadd.s32 %s117, 1
      %p121 = scmp.eq.s32.totalorder %s20, 1
      %p122 = scmp.ne.s32.totalorder %s117, %s119
      %p123 = scmp.eq.s32.totalorder %s20, 0
      %p124 = por %p122, %p123
      %p125 = scmp.ne.s32.totalorder %s117, %s119
      %p126 = scmp.eq.s32.totalorder %s25, 1
      %p127 = por %p125, %p126
      %p128 = scmp.ne.s32.totalorder %s119, %s120
      %p129 = scmp.eq.s32.totalorder %s25, 0
      %p130 = por %p128, %p129
      %p131 = scmp.ne.s32.totalorder %s119, %s120
      %p132 = scmp.eq.s32.totalorder %s26, 1
      %p133 = por %p131, %p132
      %p135 = scmp.ne.s32.totalorder %s120, %s134
      %p136 = scmp.eq.s32.totalorder %s26, 0
      %p137 = por %p135, %p136
      %s139 = sadd.s32 %s138, 1
      %p142 = scmp.eq.s32.totalorder %s20, 1
      %p143 = scmp.ne.s32.totalorder %s138, %s140
      %p144 = scmp.eq.s32.totalorder %s20, 0
      %p145 = por %p143, %p144
      %p146 = scmp.ne.s32.totalorder %s138, %s140
      %p147 = scmp.eq.s32.totalorder %s25, 1
      %p148 = por %p146, %p147
      %p149 = scmp.ne.s32.totalorder %s140, %s141
      %p150 = scmp.eq.s32.totalorder %s25, 0
      %p151 = por %p149, %p150
      %p152 = scmp.ne.s32.totalorder %s140, %s141
      %p153 = scmp.eq.s32.totalorder %s26, 1
      %p154 = por %p152, %p153
      %p156 = scmp.ne.s32.totalorder %s141, %s155
      %p157 = scmp.eq.s32.totalorder %s26, 0
      %p158 = por %p156, %p157
      %s160 = sadd.s32 %s159, 1
      %p163 = scmp.eq.s32.totalorder %s20, 1
      %p164 = scmp.ne.s32.totalorder %s159, %s161
      %p165 = scmp.eq.s32.totalorder %s20, 0
      %p166 = por %p164, %p165
      %p167 = scmp.ne.s32.totalorder %s159, %s161
      %p168 = scmp.eq.s32.totalorder %s25, 1
      %p169 = por %p167, %p168
      %p170 = scmp.ne.s32.totalorder %s161, %s162
      %p171 = scmp.eq.s32.totalorder %s25, 0
      %p172 = por %p170, %p171
      %p173 = scmp.ne.s32.totalorder %s161, %s162
      %p174 = scmp.eq.s32.totalorder %s26, 1
      %p175 = por %p173, %p174
      %p177 = scmp.ne.s32.totalorder %s162, %s176
      %p178 = scmp.eq.s32.totalorder %s26, 0
      %p179 = por %p177, %p178
      %s181 = sadd.s32 %s180, 1
      %p184 = scmp.eq.s32.totalorder %s20, 1
      %p185 = scmp.ne.s32.totalorder %s180, %s182
      %p186 = scmp.eq.s32.totalorder %s20, 0
      %p187 = por %p185, %p186
      %p188 = scmp.ne.s32.totalorder %s180, %s182
      %p189 = scmp.eq.s32.totalorder %s25, 1
      %p190 = por %p188, %p189
      %p191 = scmp.ne.s32.totalorder %s182, %s183
      %p192 = scmp.eq.s32.totalorder %s25, 0
      %p193 = por %p191, %p192
      %p194 = scmp.ne.s32.totalorder %s182, %s183
      %p195 = scmp.eq.s32.totalorder %s26, 1
      %p196 = por %p194, %p195
      %p198 = scmp.ne.s32.totalorder %s183, %s197
      %p199 = scmp.eq.s32.totalorder %s26, 0
      %p200 = por %p198, %p199
      %s202 = sadd.s32 %s201, 1
      %p205 = scmp.eq.s32.totalorder %s20, 1
      %p206 = scmp.ne.s32.totalorder %s201, %s203
      %p207 = scmp.eq.s32.totalorder %s20, 0
      %p208 = por %p206, %p207
      %p209 = scmp.ne.s32.totalorder %s201, %s203
      %p210 = scmp.eq.s32.totalorder %s25, 1
      %p211 = por %p209, %p210
      %p212 = scmp.ne.s32.totalorder %s203, %s204
      %p213 = scmp.eq.s32.totalorder %s25, 0
      %p214 = por %p212, %p213
      %p215 = scmp.ne.s32.totalorder %s203, %s204
      %p216 = scmp.eq.s32.totalorder %s26, 1
      %p217 = por %p215, %p216
      %p219 = scmp.ne.s32.totalorder %s204, %s218
      %p220 = scmp.eq.s32.totalorder %s26, 0
      %p221 = por %p219, %p220
      %s222 = ssub.s32 %s20, %s27
      %p223 = scmp.eq.s32.totalorder %s222, 0
      %s225 = sadd.s32 %s224, 1
      %s226 = scalar_select %p223, %s224, %s225
      %p229 = pneg %p223
      %p230 = scmp.eq.s32.totalorder %s20, 1
      %p231 = por %p229, %p230
      %p232 = scmp.ne.s32.totalorder %s224, %s227
      %p233 = scmp.eq.s32.totalorder %s20, 0
      %p234 = por %p232, %p233
      %p235 = scmp.ne.s32.totalorder %s224, %s227
      %p236 = scmp.eq.s32.totalorder %s25, 1
      %p237 = por %p235, %p236
      %p238 = scmp.ne.s32.totalorder %s227, %s228
      %p239 = scmp.eq.s32.totalorder %s25, 0
      %p240 = por %p238, %p239
      %p241 = scmp.ne.s32.totalorder %s227, %s228
      %p242 = scmp.eq.s32.totalorder %s26, 1
      %p243 = por %p241, %p242
      %p245 = scmp.ne.s32.totalorder %s228, %s244
      %p246 = scmp.eq.s32.totalorder %s26, 0
      %p247 = por %p245, %p246
      %p248 = scmp.le.s32.totalorder 1, %s20
      %p249 = scmp.lt.s32.totalorder %s20, 3
      %p250 = pnand %p248, %p249
      %p251 = pneg %p250
      // Predicated region
      $region9: #{tpu_custom_call.1} parent=5 // pred_check
        _
      $region10: #{tpu_custom_call.1} parent=5 // pred_check_branch
        %253 = sbr.rel (%p250) target = $region12
      $region11: #{tpu_custom_call.1} parent=5 // pred_region
        %s254 = ssub.s32 %s20, 1
        // Predicated region
        $region13: #{tpu_custom_call.1} parent=11 // pred_check
          %p255 = pneg %p67
        $region14: #{tpu_custom_call.1} parent=11 // pred_check_branch
          %257 = sbr.rel (%p255) target = $region16
        $region15: #{tpu_custom_call.1} parent=11 // pred_region
          _
        $region16: #{tpu_custom_call.1} parent=11 // pred_fallthru
          _
        // Predicated region
        $region17: #{tpu_custom_call.1} parent=11 // pred_check
          %p258 = pneg %p88
        $region18: #{tpu_custom_call.1} parent=11 // pred_check_branch
          %260 = sbr.rel (%p258) target = $region20
        $region19: #{tpu_custom_call.1} parent=11 // pred_region
          _
        $region20: #{tpu_custom_call.1} parent=11 // pred_fallthru
          _
        // Predicated region
        $region21: #{tpu_custom_call.1} parent=11 // pred_check
          %p261 = pneg %p109
        $region22: #{tpu_custom_call.1} parent=11 // pred_check_branch
          %263 = sbr.rel (%p261) target = $region24
        $region23: #{tpu_custom_call.1} parent=11 // pred_region
          _
        $region24: #{tpu_custom_call.1} parent=11 // pred_fallthru
          _
        // Predicated region
        $region25: #{tpu_custom_call.1} parent=11 // pred_check
          %p264 = pneg %p130
        $region26: #{tpu_custom_call.1} parent=11 // pred_check_branch
          %266 = sbr.rel (%p264) target = $region28
        $region27: #{tpu_custom_call.1} parent=11 // pred_region
          _
        $region28: #{tpu_custom_call.1} parent=11 // pred_fallthru
          _
        // Predicated region
        $region29: #{tpu_custom_call.1} parent=11 // pred_check
          %p267 = pneg %p151
        $region30: #{tpu_custom_call.1} parent=11 // pred_check_branch
          %269 = sbr.rel (%p267) target = $region32
        $region31: #{tpu_custom_call.1} parent=11 // pred_region
          _
        $region32: #{tpu_custom_call.1} parent=11 // pred_fallthru
          _
        // Predicated region
        $region33: #{tpu_custom_call.1} parent=11 // pred_check
          %p270 = pneg %p172
        $region34: #{tpu_custom_call.1} parent=11 // pred_check_branch
          %272 = sbr.rel (%p270) target = $region36
        $region35: #{tpu_custom_call.1} parent=11 // pred_region
          _
        $region36: #{tpu_custom_call.1} parent=11 // pred_fallthru
          _
        // Predicated region
        $region37: #{tpu_custom_call.1} parent=11 // pred_check
          %p273 = pneg %p193
        $region38: #{tpu_custom_call.1} parent=11 // pred_check_branch
          %275 = sbr.rel (%p273) target = $region40
        $region39: #{tpu_custom_call.1} parent=11 // pred_region
          _
        $region40: #{tpu_custom_call.1} parent=11 // pred_fallthru
          _
        // Predicated region
        $region41: #{tpu_custom_call.1} parent=11 // pred_check
          %p276 = pneg %p214
        $region42: #{tpu_custom_call.1} parent=11 // pred_check_branch
          %278 = sbr.rel (%p276) target = $region44
        $region43: #{tpu_custom_call.1} parent=11 // pred_region
          _
        $region44: #{tpu_custom_call.1} parent=11 // pred_fallthru
          _
      $region12: #{tpu_custom_call.1} parent=5 // pred_fallthru
        _
      %p279 = scmp.lt.s32.totalorder %s20, 2
      // Predicated region
      $region45: #{tpu_custom_call.1} parent=5 // pred_check
        %p280 = pneg %p279
      $region46: #{tpu_custom_call.1} parent=5 // pred_check_branch
        %282 = sbr.rel (%p280) target = $region48
      $region47: #{tpu_custom_call.1} parent=5 // pred_region
        // Predicated region
        $region49: #{tpu_custom_call.1} parent=47 // pred_check
          %p283 = pneg %p40
        $region50: #{tpu_custom_call.1} parent=47 // pred_check_branch
          %285 = sbr.rel (%p283) target = $region52
        $region51: #{tpu_custom_call.1} parent=47 // pred_region
          %s286 = smul.u32 16, %s20
          %p287 = scmp.lt.s32.totalorder %s286, 31
          %s288 = scalar_select %p287, %s286, 31
          %s289 = smul.addr %s288, 8
          %s290 = scalar_lea.vmem %s0, %s289
          %s291 = smul.u32 16, %s20
        $region52: #{tpu_custom_call.1} parent=47 // pred_fallthru
          _
      $region48: #{tpu_custom_call.1} parent=5 // pred_fallthru
        _
      %p292 = scmp.le.s32.totalorder 1, %s20
      %p293 = scmp.lt.s32.totalorder %s20, 3
      %p294 = pnand %p292, %p293
      %p295 = pneg %p294
      // Predicated region
      $region53: #{tpu_custom_call.1} parent=5 // pred_check
        _
      $region54: #{tpu_custom_call.1} parent=5 // pred_check_branch
        %297 = sbr.rel (%p294) target = $region56
      $region55: #{tpu_custom_call.1} parent=5 // pred_region
        %s298 = ssub.s32 %s20, 1
        %s299 = smul.u32 16, %s25
        %p300 = scmp.lt.s32.totalorder %s299, 31
        %s301 = scalar_select %p300, %s299, 31
        %s302 = smul.addr %s301, 8
        %s303 = scalar_lea.vmem %s0, %s302
        %p304 = pneg %p46
        %p305 = pneg %p43
        %p306 = pneg %p67
        %p307 = pneg %p64
        %p308 = pneg %p88
        %p309 = pneg %p85
        %p310 = pneg %p109
        %p311 = pneg %p106
        %p312 = pneg %p130
        %p313 = pneg %p127
        %p314 = pneg %p151
        %p315 = pneg %p148
        %p316 = pneg %p172
        %p317 = pneg %p169
        %p318 = pneg %p193
        %p319 = pneg %p190
        %p320 = pneg %p214
        %p321 = pneg %p211
        %p322 = pneg %p240
        %p323 = pneg %p237
        %s324 = sand.u32 %s227, 1
        %s325 = scalar_lea.sflag [#allocation4], %s324
        %s326 = sand.u32 %s227, 1
        %s327 = scalar_lea.vmem [#allocation3], %s326
        %s328 = smul.u32 16, %s25
        %p329 = scmp.lt.s32.totalorder %s328, 31
        %s330 = scalar_select %p329, %s328, 31
        %s331 = smul.addr %s330, 8
        %s332 = scalar_lea.vmem %s0, %s331
        %s333 = smul.u32 16, %s25
        %v334 = vld [vmem:[%s1] sm:$0xff]
        %v335 = vld [vmem:[%s1 + $0x8] sm:$0xff]
        %v336 = vld [vmem:[%s1 + $0x10] sm:$0xff]
        %v337 = vld [vmem:[%s1 + $0x18] sm:$0xff]
        %v338 = vld [vmem:[%s1 + $0x20] sm:$0xff]
        %v339 = vld [vmem:[%s1 + $0x28] sm:$0xff]
        %v340 = vld [vmem:[%s1 + $0x30] sm:$0xff]
        %v341 = vld [vmem:[%s1 + $0x38] sm:$0xff]
        %v342 = vld [vmem:[%s332] sm:$0xff]
        %v343 = vld [vmem:[%s332 + $0x8] sm:$0xff]
        %v344 = vld [vmem:[%s332 + $0x10] sm:$0xff]
        %v345 = vld [vmem:[%s332 + $0x18] sm:$0xff]
        %v346 = vld [vmem:[%s332 + $0x20] sm:$0xff]
        %v347 = vld [vmem:[%s332 + $0x28] sm:$0xff]
        %v348 = vld [vmem:[%s332 + $0x30] sm:$0xff]
        %v349 = vld [vmem:[%s332 + $0x38] sm:$0xff]
        %v350 = vld [vmem:[%s332 + $0x40] sm:$0xff]
        %v351 = vld [vmem:[%s332 + $0x48] sm:$0xff]
        %v352 = vld [vmem:[%s332 + $0x50] sm:$0xff]
        %v353 = vld [vmem:[%s332 + $0x58] sm:$0xff]
        %v354 = vld [vmem:[%s332 + $0x60] sm:$0xff]
        %v355 = vld [vmem:[%s332 + $0x68] sm:$0xff]
        %v356 = vld [vmem:[%s332 + $0x70] sm:$0xff]
        %v357 = vld [vmem:[%s332 + $0x78] sm:$0xff]
        %v358 = vld [vmem:[%s2] sm:$0xff]
        %v359 = vld [vmem:[%s2 + $0x8] sm:$0xff]
        %v360 = vld [vmem:[%s2 + $0x10] sm:$0xff]
        %v361 = vld [vmem:[%s2 + $0x18] sm:$0xff]
        %v362 = vld [vmem:[%s2 + $0x20] sm:$0xff]
        %v363 = vld [vmem:[%s2 + $0x28] sm:$0xff]
        %v364 = vld [vmem:[%s2 + $0x30] sm:$0xff]
        %v365 = vld [vmem:[%s2 + $0x38] sm:$0xff]
        %367 = vset.pattern.permute.xlu0 0
        %368 = vperm.xlu0 %367, %v358
        %v369 = vpop.permute.xlu0 %368
        %372 = vset.pattern.permute.xlu0 0
        %373 = vperm.xlu0 %372, %v359
        %v374 = vpop.permute.xlu0 %373
        %377 = vset.pattern.permute.xlu0 0
        %378 = vperm.xlu0 %377, %v360
        %v379 = vpop.permute.xlu0 %378
        %382 = vset.pattern.permute.xlu0 0
        %383 = vperm.xlu0 %382, %v361
        %v384 = vpop.permute.xlu0 %383
        %387 = vset.pattern.permute.xlu0 0
        %388 = vperm.xlu0 %387, %v362
        %v389 = vpop.permute.xlu0 %388
        %392 = vset.pattern.permute.xlu0 0
        %393 = vperm.xlu0 %392, %v363
        %v394 = vpop.permute.xlu0 %393
        %397 = vset.pattern.permute.xlu0 0
        %398 = vperm.xlu0 %397, %v364
        %v399 = vpop.permute.xlu0 %398
        %402 = vset.pattern.permute.xlu0 0
        %403 = vperm.xlu0 %402, %v365
        %v404 = vpop.permute.xlu0 %403
        %vm406 = vcmask 261120
        %v408 = vsel %vm406, %v334, 0
        %v411 = vsel %vm406, %v335, 0
        %v414 = vsel %vm406, %v336, 0
        %v417 = vsel %vm406, %v337, 0
        %v420 = vsel %vm406, %v338, 0
        %v423 = vsel %vm406, %v339, 0
        %v426 = vsel %vm406, %v340, 0
        %v429 = vsel %vm406, %v341, 0
        %v432 = vsel %vm406, %v342, 0
        %v435 = vsel %vm406, %v343, 0
        %v438 = vsel %vm406, %v344, 0
        %v441 = vsel %vm406, %v345, 0
        %v444 = vsel %vm406, %v346, 0
        %v447 = vsel %vm406, %v347, 0
        %v450 = vsel %vm406, %v348, 0
        %v453 = vsel %vm406, %v349, 0
        %v456 = vsel %vm406, %v350, 0
        %v459 = vsel %vm406, %v351, 0
        %v462 = vsel %vm406, %v352, 0
        %v465 = vsel %vm406, %v353, 0
        %v468 = vsel %vm406, %v354, 0
        %v471 = vsel %vm406, %v355, 0
        %v474 = vsel %vm406, %v356, 0
        %v477 = vsel %vm406, %v357, 0
        %479 = vmatprep.subr.mxu0 0.0
        %480 = vmatpush1.xpose.msra.mxu0 %v432
        %481 = vmatprep.subr.mxu0 0.0
        %482 = vmatpush1.xpose.msra.mxu0 %v435
        %483 = vmatprep.subr.mxu0 0.0
        %484 = vmatpush1.xpose.msra.mxu0 %v438
        %485 = vmatprep.subr.mxu0 0.0
        %486 = vmatpush1.xpose.msra.mxu0 %v441
        %487 = vmatprep.subr.mxu0 0.0
        %488 = vmatpush1.xpose.msra.mxu0 %v444
        %489 = vmatprep.subr.mxu0 0.0
        %490 = vmatpush1.xpose.msra.mxu0 %v447
        %491 = vmatprep.subr.mxu0 0.0
        %492 = vmatpush1.xpose.msra.mxu0 %v450
        %493 = vmatprep.subr.mxu0 0.0
        %494 = vmatpush1.xpose.msra.mxu0 %v453
        %495 = vmatprep.subr.mxu0 0.0
        %496 = vmatpush1.xpose.msra.mxu0 %v456
        %497 = vmatprep.subr.mxu0 0.0
        %498 = vmatpush1.xpose.msra.mxu0 %v459
        %499 = vmatprep.subr.mxu0 0.0
        %500 = vmatpush1.xpose.msra.mxu0 %v462
        %501 = vmatprep.subr.mxu0 0.0
        %502 = vmatpush1.xpose.msra.mxu0 %v465
        %503 = vmatprep.subr.mxu0 0.0
        %504 = vmatpush1.xpose.msra.mxu0 %v468
        %505 = vmatprep.subr.mxu0 0.0
        %506 = vmatpush1.xpose.msra.mxu0 %v471
        %507 = vmatprep.subr.mxu0 0.0
        %508 = vmatpush1.xpose.msra.mxu0 %v474
        %509 = vmatprep.subr.mxu0 0.0
        %510 = vmatpush1.xpose.msra.mxu0 %v477
        %511 = vmatprep.subr.mxu0 0.0
        %512 = vmatpush1.xpose.msra.mxu0 0.0
        %513 = vmatprep.subr.mxu0 0.0
        %514 = vmatpush1.xpose.msra.mxu0 0.0
        %515 = vmatprep.subr.mxu0 0.0
        %516 = vmatpush1.xpose.msra.mxu0 0.0
        %517 = vmatprep.subr.mxu0 0.0
        %518 = vmatpush1.xpose.msra.mxu0 0.0
        %519 = vmatprep.subr.mxu0 0.0
        %520 = vmatpush1.xpose.msra.mxu0 0.0
        %521 = vmatprep.subr.mxu0 0.0
        %522 = vmatpush1.xpose.msra.mxu0 0.0
        %523 = vmatprep.subr.mxu0 0.0
        %524 = vmatpush1.xpose.msra.mxu0 0.0
        %525 = vmatprep.subr.mxu0 0.0
        %526 = vmatpush1.xpose.msra.mxu0 0.0
        %527 = vmatprep.subr.mxu0 0.0
        %528 = vmatpush1.xpose.msra.mxu0 0.0
        %529 = vmatprep.subr.mxu0 0.0
        %530 = vmatpush1.xpose.msra.mxu0 0.0
        %531 = vmatprep.subr.mxu0 0.0
        %532 = vmatpush1.xpose.msra.mxu0 0.0
        %533 = vmatprep.subr.mxu0 0.0
        %534 = vmatpush1.xpose.msra.mxu0 0.0
        %535 = vmatprep.subr.mxu0 0.0
        %536 = vmatpush1.xpose.msra.mxu0 0.0
        %537 = vmatprep.subr.mxu0 0.0
        %538 = vmatpush1.xpose.msra.mxu0 0.0
        %539 = vmatprep.subr.mxu0 0.0
        %540 = vmatpush1.xpose.msra.mxu0 0.0
        %541 = vmatprep.subr.mxu0 0.0
        %542 = vmatpush1.xpose.msra.mxu0 0.0
        %543 = vmatprep.mubr.f32.mxu0 0.0
        %544 = vmatmul.mubr.f32.gmra.mrb[0].mxu0 %v408
        %v545 = vpop.f32.mrb[0].mxu0
        %v546 = vadd.f32 %v369, %v545
        %v547 = vpop.f32.mrb[0].mxu0
        %548 = vmatprep.mubr.f32.mxu0 0.0
        %549 = vmatmul.mubr.f32.gmra.mrb[0].mxu0 %v411
        %v550 = vpop.f32.mrb[0].mxu0
        %v551 = vadd.f32 %v374, %v550
        %v552 = vpop.f32.mrb[0].mxu0
        %553 = vmatprep.mubr.f32.mxu0 0.0
        %554 = vmatmul.mubr.f32.gmra.mrb[0].mxu0 %v414
        %v555 = vpop.f32.mrb[0].mxu0
        %v556 = vadd.f32 %v379, %v555
        %v557 = vpop.f32.mrb[0].mxu0
        %558 = vmatprep.mubr.f32.mxu0 0.0
        %559 = vmatmul.mubr.f32.gmra.mrb[0].mxu0 %v417
        %v560 = vpop.f32.mrb[0].mxu0
        %v561 = vadd.f32 %v384, %v560
        %v562 = vpop.f32.mrb[0].mxu0
        %563 = vmatprep.mubr.f32.mxu0 0.0
        %564 = vmatmul.mubr.f32.gmra.mrb[0].mxu0 %v420
        %v565 = vpop.f32.mrb[0].mxu0
        %v566 = vadd.f32 %v389, %v565
        %v567 = vpop.f32.mrb[0].mxu0
        %568 = vmatprep.mubr.f32.mxu0 0.0
        %569 = vmatmul.mubr.f32.gmra.mrb[0].mxu0 %v423
        %v570 = vpop.f32.mrb[0].mxu0
        %v571 = vadd.f32 %v394, %v570
        %v572 = vpop.f32.mrb[0].mxu0
        %573 = vmatprep.mubr.f32.mxu0 0.0
        %574 = vmatmul.mubr.f32.gmra.mrb[0].mxu0 %v426
        %v575 = vpop.f32.mrb[0].mxu0
        %v576 = vadd.f32 %v399, %v575
        %v577 = vpop.f32.mrb[0].mxu0
        %578 = vmatprep.mubr.f32.mxu0 0.0
        %579 = vmatmul.mubr.f32.gmra.mrb[0].mxu0 %v429
        %v580 = vpop.f32.mrb[0].mxu0
        %v581 = vadd.f32 %v404, %v580
        %v582 = vpop.f32.mrb[0].mxu0
        %583 = vdwg.mxu0
        %v584 = vmax.f32 %v546, 0.0
        %v585 = vmax.f32 %v551, 0.0
        %v586 = vmax.f32 %v556, 0.0
        %v587 = vmax.f32 %v561, 0.0
        %v588 = vmax.f32 %v566, 0.0
        %v589 = vmax.f32 %v571, 0.0
        %v590 = vmax.f32 %v576, 0.0
        %v591 = vmax.f32 %v581, 0.0
        %v592 = vld [vmem:[%s3] sm:$0xff]
        %v593 = vld [vmem:[%s3 + $0x8] sm:$0xff]
        %v594 = vld [vmem:[%s3 + $0x10] sm:$0xff]
        %v595 = vld [vmem:[%s3 + $0x18] sm:$0xff]
        %v596 = vld [vmem:[%s4] sm:$0xff]
        %v597 = vld [vmem:[%s4 + $0x8] sm:$0xff]
        %v598 = vld [vmem:[%s4 + $0x10] sm:$0xff]
        %v599 = vld [vmem:[%s4 + $0x18] sm:$0xff]
        %601 = vset.pattern.permute.xlu0 0
        %602 = vperm.xlu0 %601, %v596
        %v603 = vpop.permute.xlu0 %602
        %606 = vset.pattern.permute.xlu0 0
        %607 = vperm.xlu0 %606, %v597
        %v608 = vpop.permute.xlu0 %607
        %611 = vset.pattern.permute.xlu0 0
        %612 = vperm.xlu0 %611, %v598
        %v613 = vpop.permute.xlu0 %612
        %616 = vset.pattern.permute.xlu0 0
        %617 = vperm.xlu0 %616, %v599
        %v618 = vpop.permute.xlu0 %617
        %vm620 = vcmask 523264
        %v622 = vsel %vm620, %v592, 0
        %v625 = vsel %vm620, %v593, 0
        %v628 = vsel %vm620, %v594, 0
        %v631 = vsel %vm620, %v595, 0
        %633 = vmatprep.subr.mxu0 0.0
        %634 = vmatpush1.msra.mxu0 %v584
        %635 = vmatprep.subr.mxu0 0.0
        %636 = vmatpush1.msra.mxu0 %v585
        %637 = vmatprep.subr.mxu0 0.0
        %638 = vmatpush1.msra.mxu0 %v586
        %639 = vmatprep.subr.mxu0 0.0
        %640 = vmatpush1.msra.mxu0 %v587
        %641 = vmatprep.subr.mxu0 0.0
        %642 = vmatpush1.msra.mxu0 %v588
        %643 = vmatprep.subr.mxu0 0.0
        %644 = vmatpush1.msra.mxu0 %v589
        %645 = vmatprep.subr.mxu0 0.0
        %646 = vmatpush1.msra.mxu0 %v590
        %647 = vmatprep.subr.mxu0 0.0
        %648 = vmatpush1.msra.mxu0 %v591
        %649 = vmatprep.subr.mxu0 0.0
        %650 = vmatpush1.msra.mxu0 0.0
        %651 = vmatprep.subr.mxu0 0.0
        %652 = vmatpush1.msra.mxu0 0.0
        %653 = vmatprep.subr.mxu0 0.0
        %654 = vmatpush1.msra.mxu0 0.0
        %655 = vmatprep.subr.mxu0 0.0
        %656 = vmatpush1.msra.mxu0 0.0
        %657 = vmatprep.subr.mxu0 0.0
        %658 = vmatpush1.msra.mxu0 0.0
        %659 = vmatprep.subr.mxu0 0.0
        %660 = vmatpush1.msra.mxu0 0.0
        %661 = vmatprep.subr.mxu0 0.0
        %662 = vmatpush1.msra.mxu0 0.0
        %663 = vmatprep.subr.mxu0 0.0
        %664 = vmatpush1.msra.mxu0 0.0
        %665 = vmatprep.subr.mxu0 0.0
        %666 = vmatpush1.msra.mxu0 0.0
        %667 = vmatprep.subr.mxu0 0.0
        %668 = vmatpush1.msra.mxu0 0.0
        %669 = vmatprep.subr.mxu0 0.0
        %670 = vmatpush1.msra.mxu0 0.0
        %671 = vmatprep.subr.mxu0 0.0
        %672 = vmatpush1.msra.mxu0 0.0
        %673 = vmatprep.subr.mxu0 0.0
        %674 = vmatpush1.msra.mxu0 0.0
        %675 = vmatprep.subr.mxu0 0.0
        %676 = vmatpush1.msra.mxu0 0.0
        %677 = vmatprep.subr.mxu0 0.0
        %678 = vmatpush1.msra.mxu0 0.0
        %679 = vmatprep.subr.mxu0 0.0
        %680 = vmatpush1.msra.mxu0 0.0
        %681 = vmatprep.subr.mxu0 0.0
        %682 = vmatpush1.msra.mxu0 0.0
        %683 = vmatprep.subr.mxu0 0.0
        %684 = vmatpush1.msra.mxu0 0.0
        %685 = vmatprep.subr.mxu0 0.0
        %686 = vmatpush1.msra.mxu0 0.0
        %687 = vmatprep.subr.mxu0 0.0
        %688 = vmatpush1.msra.mxu0 0.0
        %689 = vmatprep.subr.mxu0 0.0
        %690 = vmatpush1.msra.mxu0 0.0
        %691 = vmatprep.subr.mxu0 0.0
        %692 = vmatpush1.msra.mxu0 0.0
        %693 = vmatprep.subr.mxu0 0.0
        %694 = vmatpush1.msra.mxu0 0.0
        %695 = vmatprep.subr.mxu0 0.0
        %696 = vmatpush1.msra.mxu0 0.0
        %697 = vmatprep.mubr.f32.mxu0 0.0
        %698 = vmatmul.mubr.f32.gmra.mrb[0].mxu0 %v622
        %v699 = vpop.f32.mrb[0].mxu0
        %v700 = vadd.f32 %v603, %v699
        %v701 = vpop.f32.mrb[0].mxu0
        %702 = vmatprep.mubr.f32.mxu0 0.0
        %703 = vmatmul.mubr.f32.gmra.mrb[0].mxu0 %v625
        %v704 = vpop.f32.mrb[0].mxu0
        %v705 = vadd.f32 %v608, %v704
        %v706 = vpop.f32.mrb[0].mxu0
        %707 = vmatprep.mubr.f32.mxu0 0.0
        %708 = vmatmul.mubr.f32.gmra.mrb[0].mxu0 %v628
        %v709 = vpop.f32.mrb[0].mxu0
        %v710 = vadd.f32 %v613, %v709
        %v711 = vpop.f32.mrb[0].mxu0
        %712 = vmatprep.mubr.f32.mxu0 0.0
        %713 = vmatmul.mubr.f32.gmra.mrb[0].mxu0 %v631
        %v714 = vpop.f32.mrb[0].mxu0
        %v715 = vadd.f32 %v618, %v714
        %v716 = vpop.f32.mrb[0].mxu0
        %717 = vdwg.mxu0
        %v718 = vmax.f32 %v700, 0.0
        %v719 = vmax.f32 %v705, 0.0
        %v720 = vmax.f32 %v710, 0.0
        %v721 = vmax.f32 %v715, 0.0
        %v722 = vld [vmem:[%s5] sm:$0xff]
        %v723 = vld [vmem:[%s5 + $0x8] sm:$0xff]
        %v724 = vld [vmem:[%s6] sm:$0xff]
        %v725 = vld [vmem:[%s6 + $0x8] sm:$0xff]
        %727 = vset.pattern.permute.xlu0 0
        %728 = vperm.xlu0 %727, %v724
        %v729 = vpop.permute.xlu0 %728
        %732 = vset.pattern.permute.xlu0 0
        %733 = vperm.xlu0 %732, %v725
        %v734 = vpop.permute.xlu0 %733
        %v737 = vsel %vm406, %v722, 0
        %v740 = vsel %vm406, %v723, 0
        %742 = vmatprep.subr.mxu0 0.0
        %743 = vmatpush1.msra.mxu0 %v718
        %744 = vmatprep.subr.mxu0 0.0
        %745 = vmatpush1.msra.mxu0 %v719
        %746 = vmatprep.subr.mxu0 0.0
        %747 = vmatpush1.msra.mxu0 %v720
        %748 = vmatprep.subr.mxu0 0.0
        %749 = vmatpush1.msra.mxu0 %v721
        %750 = vmatprep.subr.mxu0 0.0
        %751 = vmatpush1.msra.mxu0 0.0
        %752 = vmatprep.subr.mxu0 0.0
        %753 = vmatpush1.msra.mxu0 0.0
        %754 = vmatprep.subr.mxu0 0.0
        %755 = vmatpush1.msra.mxu0 0.0
        %756 = vmatprep.subr.mxu0 0.0
        %757 = vmatpush1.msra.mxu0 0.0
        %758 = vmatprep.subr.mxu0 0.0
        %759 = vmatpush1.msra.mxu0 0.0
        %760 = vmatprep.subr.mxu0 0.0
        %761 = vmatpush1.msra.mxu0 0.0
        %762 = vmatprep.subr.mxu0 0.0
        %763 = vmatpush1.msra.mxu0 0.0
        %764 = vmatprep.subr.mxu0 0.0
        %765 = vmatpush1.msra.mxu0 0.0
        %766 = vmatprep.subr.mxu0 0.0
        %767 = vmatpush1.msra.mxu0 0.0
        %768 = vmatprep.subr.mxu0 0.0
        %769 = vmatpush1.msra.mxu0 0.0
        %770 = vmatprep.subr.mxu0 0.0
        %771 = vmatpush1.msra.mxu0 0.0
        %772 = vmatprep.subr.mxu0 0.0
        %773 = vmatpush1.msra.mxu0 0.0
        %774 = vmatprep.subr.mxu0 0.0
        %775 = vmatpush1.msra.mxu0 0.0
        %776 = vmatprep.subr.mxu0 0.0
        %777 = vmatpush1.msra.mxu0 0.0
        %778 = vmatprep.subr.mxu0 0.0
        %779 = vmatpush1.msra.mxu0 0.0
        %780 = vmatprep.subr.mxu0 0.0
        %781 = vmatpush1.msra.mxu0 0.0
        %782 = vmatprep.subr.mxu0 0.0
        %783 = vmatpush1.msra.mxu0 0.0
        %784 = vmatprep.subr.mxu0 0.0
        %785 = vmatpush1.msra.mxu0 0.0
        %786 = vmatprep.subr.mxu0 0.0
        %787 = vmatpush1.msra.mxu0 0.0
        %788 = vmatprep.subr.mxu0 0.0
        %789 = vmatpush1.msra.mxu0 0.0
        %790 = vmatprep.subr.mxu0 0.0
        %791 = vmatpush1.msra.mxu0 0.0
        %792 = vmatprep.subr.mxu0 0.0
        %793 = vmatpush1.msra.mxu0 0.0
        %794 = vmatprep.subr.mxu0 0.0
        %795 = vmatpush1.msra.mxu0 0.0
        %796 = vmatprep.subr.mxu0 0.0
        %797 = vmatpush1.msra.mxu0 0.0
        %798 = vmatprep.subr.mxu0 0.0
        %799 = vmatpush1.msra.mxu0 0.0
        %800 = vmatprep.subr.mxu0 0.0
        %801 = vmatpush1.msra.mxu0 0.0
        %802 = vmatprep.subr.mxu0 0.0
        %803 = vmatpush1.msra.mxu0 0.0
        %804 = vmatprep.subr.mxu0 0.0
        %805 = vmatpush1.msra.mxu0 0.0
        %806 = vmatprep.mubr.f32.mxu0 0.0
        %807 = vmatmul.mubr.f32.gmra.mrb[0].mxu0 %v737
        %v808 = vpop.f32.mrb[0].mxu0
        %v809 = vadd.f32 %v729, %v808
        %v810 = vpop.f32.mrb[0].mxu0
        %811 = vmatprep.mubr.f32.mxu0 0.0
        %812 = vmatmul.mubr.f32.gmra.mrb[0].mxu0 %v740
        %v813 = vpop.f32.mrb[0].mxu0
        %v814 = vadd.f32 %v734, %v813
        %v815 = vpop.f32.mrb[0].mxu0
        %816 = vdwg.mxu0
        %v817 = vmax.f32 %v809, 0.0
        %v818 = vmax.f32 %v814, 0.0
        %v819 = vld [vmem:[%s7] sm:$0xff]
        %v820 = vld [vmem:[%s7 + $0x8] sm:$0xff]
        %822 = vset.pattern.permute.xlu0 0
        %823 = vperm.xlu0 %822, %v819
        %v824 = vpop.permute.xlu0 %823
        %827 = vset.pattern.permute.xlu0 0
        %828 = vperm.xlu0 %827, %v820
        %v829 = vpop.permute.xlu0 %828
        %v831 = vmul.f32 %v824, %v817
        %v832 = vmul.f32 %v829, %v818
        %v833 = vadd.f32 %v831, %v832
        %v834 = vrot.slane %v833, 4
        %v835 = vadd.f32 %v833, %v834
        %v836 = vrot.slane %v835, 2
        %v837 = vadd.f32 %v835, %v836
        %v838 = vrot.slane %v837, 1
        %v839 = vadd.f32 %v837, %v838
        %v840 = vld [vmem:[#allocation2] sm:$0x1]
        %842 = vset.pattern.permute.xlu0 0
        %843 = vperm.xlu0 %842, %v840
        %v844 = vpop.permute.xlu0 %843
        %v846 = vlaneseq
        %v847 = vshrl.u32 %v846, 7
        %v848 = vsub.s32 0, %v847
        %v849 = vrot.slane %v844, %v848
        %v850 = vadd.f32 %v839, %v849
        %v851 = vtanh.pop %v850
        %852 = vst [vmem:[%s327] sm:$0x1] %v851
        %s853 = sand.u32 %s227, 1
        %s854 = scalar_lea.sflag [#allocation4], %s853
        %s855 = sand.u32 %s227, 1
        %s856 = scalar_lea.vmem [#allocation3], %s855
        // Predicated region
        $region57: #{tpu_custom_call.1} parent=55 // pred_check
          %p857 = pneg %p237
        $region58: #{tpu_custom_call.1} parent=55 // pred_check_branch
          %859 = sbr.rel (%p857) target = $region60
        $region59: #{tpu_custom_call.1} parent=55 // pred_region
          %s861 = ssub.s32 16, 16
          %862 = vsyncadd %s854, %s861
          %s863 = smul.addr %s25, 16
          %s864 = scalar_lea.hbm %s9, %s863
          %s866 = sshll.u32 %s856, 4
          %s867 = int_to_ptr.vmem [resolvable:$true] %s866
          %869 = dma.vmem_to_hbm [thread:$0]  %s867, 16, %s864, %s854
        $region60: #{tpu_custom_call.1} parent=55 // pred_fallthru
          _
      $region56: #{tpu_custom_call.1} parent=5 // pred_fallthru
        _
      %p870 = scmp.le.s32.totalorder 2, %s20
      // Predicated region
      $region61: #{tpu_custom_call.1} parent=5 // pred_check
        %p871 = pneg %p870
      $region62: #{tpu_custom_call.1} parent=5 // pred_check_branch
        %873 = sbr.rel (%p871) target = $region64
      $region63: #{tpu_custom_call.1} parent=5 // pred_region
        %s874 = ssub.s32 %s20, 2
        // Predicated region
        $region65: #{tpu_custom_call.1} parent=63 // pred_check
          %p875 = pneg %p243
        $region66: #{tpu_custom_call.1} parent=63 // pred_check_branch
          %877 = sbr.rel (%p875) target = $region68
        $region67: #{tpu_custom_call.1} parent=63 // pred_region
          %s878 = sand.u32 %s228, 1
          %s879 = scalar_lea.sflag [#allocation4], %s878
          %s880 = sand.u32 %s228, 1
          %s881 = scalar_lea.vmem [#allocation3], %s880
          %882 = dma.done %s879, 16
        $region68: #{tpu_custom_call.1} parent=63 // pred_fallthru
          _
      $region64: #{tpu_custom_call.1} parent=5 // pred_fallthru
        _
    $region6: #{tpu_custom_call.1} parent=1 // loop_footer
      %s24 = sadd.s32 1, %s20
    $region7: #{tpu_custom_call.1} parent=1 // loop_footer_branch
      %19 = sbr.rel target = $region3
    $region8: #{tpu_custom_call.1} parent=1 // loop_exit
      _
    %883 = vsyncpa [#allocation4], 1
    %s884 = scalar_lea.sflag [#allocation4], 1
    %885 = vsyncpa %s884, 1

</llo_original>
